<compile_context>
chip_gen: v6e
topology: v6e:2x2x1
jax: 0.10.0
libtpu: 0.0.40
codegen_flags: <defaults>
</compile_context>

<pallas_src>
import numpy as np
import jax
import jax.numpy as jnp
from jax.experimental import pallas as pl
from jax.experimental.pallas import tpu as pltpu


_SUBLANE = 8
_LANE = 128
_K_FUSE_MAX = 8          # above this, use a K reduction grid axis instead of a fused block


def _round_up(x, m):
    return ((x + m - 1) // m) * m


def _vmem_budgets():
    """Generation-aware VMEM budgets.

    Returns (block_budget, vmem_limit):
      block_budget : bytes the double-buffered per-step blocks may occupy (~40% of physical,
                     capped so v6e/v5e get ~51 MiB and v7x ~25 MiB).
      vmem_limit   : value for CompilerParams.vmem_limit_bytes (~75% of physical, capped).
    """
    phys = 64 * 1024 * 1024  # conservative fallback (v7x per-TC VMEM)
    try:
        info = pltpu.get_tpu_info()
        phys = int(getattr(info, "vmem_capacity_bytes", phys)) or phys
    except Exception:
        pass
    block_budget = min(int(phys * 0.40), 52 * 1024 * 1024)
    vmem_limit = min(int(phys * 0.75), 100 * 1024 * 1024)
    return block_budget, vmem_limit


def _choose_tile(R, C, bytes_per_elem, budget):
    """Pick a (bR, bC) block.

    Constraints: bR multiple of 8 (or == R), bC multiple of 128 (or == C).
    The double-buffered per-step footprint 2 * bR * bC * bytes_per_elem stays under
    `budget`. Prefers full-width (lane-dense, unmasked-store) blocks and guarantees
    >= 2 grid steps along a parallel axis whenever the shape allows it.
    """
    max_elems = max(budget // (2 * bytes_per_elem), _SUBLANE * _LANE)

    # Preferred: full-width row stripes tiled over the sublane (row) axis.
    if R > _SUBLANE and _SUBLANE * C <= max_elems:
        budget_rows = max((max_elems // C) // _SUBLANE * _SUBLANE, _SUBLANE)
        min_blocks = min(4, pl.cdiv(R, _SUBLANE))          # ensure megacore / pipelining
        n_blocks = max(pl.cdiv(R, budget_rows), min_blocks, 1)
        bR = _round_up(pl.cdiv(R, n_blocks), _SUBLANE)
        bR = max(min(bR, budget_rows), _SUBLANE)
        return min(bR, R), C

    # Fallback: rows cannot be split into multiples of 8 (R <= 8), or a full-width
    # 8-row stripe exceeds the budget -> tile the lane axis in balanced 128-multiples.
    bR = R if R <= _SUBLANE else _SUBLANE
    max_bC = max((max_elems // max(bR, 1)) // _LANE * _LANE, _LANE)
    if max_bC >= C:
        n_row_blocks = pl.cdiv(R, bR)
        if n_row_blocks >= 2 or C < 2 * _LANE:
            return bR, C
        n_cblocks = 2                                        # force >= 2 parallel steps
    else:
        n_cblocks = pl.cdiv(C, max_bC)
    bC = min(_round_up(pl.cdiv(C, n_cblocks), _LANE), max_bC)
    return bR, max(min(bC, C if C % _LANE == 0 else bC), _LANE)


# ----------------------------------------------------------------------------
# Kernel 1: local correction aggregation
#   pred = logical_or(forward_logits > 0, backward_logits > 0)
# ----------------------------------------------------------------------------
def _local_correction_kernel(fwd_ref, bwd_ref, out_ref):
    out_ref[...] = jnp.logical_or(fwd_ref[...] > 0, bwd_ref[...] > 0).astype(out_ref.dtype)


def local_correction_aggregate(fwd_logits_hwd, bwd_logits_hwd):
    """fwd/bwd mask logits (H, W, D) -> binary prediction volume (H, W, D) float32."""
    H, W, D = fwd_logits_hwd.shape
    R, C = H, W * D
    in_bytes = jnp.dtype(fwd_logits_hwd.dtype).itemsize
    fwd2 = fwd_logits_hwd.reshape(R, C)   # free contiguous view, no transpose
    bwd2 = bwd_logits_hwd.reshape(R, C)

    budget, vmem_limit = _vmem_budgets()
    # Per step: 2 inputs (native dtype) + 1 f32 output, each double-buffered by Pallas.
    bR, bC = _choose_tile(R, C, bytes_per_elem=2 * in_bytes + 4, budget=budget)
    grid = (pl.cdiv(R, bR), pl.cdiv(C, bC))
    bytes_accessed = 2 * R * C * in_bytes + R * C * 4

    out2 = pl.pallas_call(
        _local_correction_kernel,
        out_shape=jax.ShapeDtypeStruct((R, C), jnp.float32),
        grid_spec=pltpu.PrefetchScalarGridSpec(
            num_scalar_prefetch=0,
            grid=grid,
            in_specs=[
                pl.BlockSpec((bR, bC), lambda i, j: (i, j)),
                pl.BlockSpec((bR, bC), lambda i, j: (i, j)),
            ],
            out_specs=pl.BlockSpec((bR, bC), lambda i, j: (i, j)),
        ),
        compiler_params=pltpu.CompilerParams(
            dimension_semantics=("parallel", "parallel"),
            vmem_limit_bytes=vmem_limit,
        ),
        cost_estimate=pl.CostEstimate(
            flops=0, transcendentals=0, bytes_accessed=bytes_accessed
        ),
    )(fwd2, bwd2)
    return out2.reshape(H, W, D)


# ----------------------------------------------------------------------------
# Kernel 2: exemplar post-inference aggregation
#   prediction = max over objects k of (object-k mask logits > 0)
#   (mirrors the np.maximum accumulation over filtered_objects_dict)
# ----------------------------------------------------------------------------
def _exemplar_fused_kernel(logits_ref, out_ref):
    # (K, bR, bC) logits -> OR over K of thresholded masks (== max of binarized).
    out_ref[...] = jnp.any(logits_ref[...] > 0, axis=0).astype(out_ref.dtype)


def _exemplar_reduce_kernel(logits_ref, out_ref, acc_ref):
    # K is the trailing "arbitrary" grid axis; accumulate in a resident VMEM scratch.
    k = pl.program_id(2)
    cur = (logits_ref[...] > 0).astype(jnp.float32)

    @pl.when(k == 0)
    def _():
        acc_ref[...] = cur

    @pl.when(k > 0)
    def _():
        acc_ref[...] = jnp.maximum(acc_ref[...], cur)

    @pl.when(k == pl.num_programs(2) - 1)
    def _():
        out_ref[...] = acc_ref[...].astype(out_ref.dtype)


def exemplar_aggregate(exemplar_logits_khwd):
    """per-object mask logits (K, H, W, D) -> binary prediction volume (H, W, D) float32."""
    K, H, W, D = exemplar_logits_khwd.shape
    if K == 0:
        # Empty filtered-objects dict: the reference leaves the prediction volume as zeros.
        return jnp.zeros((H, W, D), jnp.float32)

    R, C = H, W * D
    in_bytes = jnp.dtype(exemplar_logits_khwd.dtype).itemsize
    logits = exemplar_logits_khwd.reshape(K, R, C)   # free contiguous view, no transpose
    budget, vmem_limit = _vmem_budgets()
    bytes_accessed = K * R * C * in_bytes + R * C * 4

    if K <= _K_FUSE_MAX:
        # Small K: fuse the K reduction in the block -> one DMA of (K, bR, bC) per step.
        bR, bC = _choose_tile(R, C, bytes_per_elem=K * in_bytes + 4, budget=budget)
        grid = (pl.cdiv(R, bR), pl.cdiv(C, bC))
        out2 = pl.pallas_call(
            _exemplar_fused_kernel,
            out_shape=jax.ShapeDtypeStruct((R, C), jnp.float32),
            grid_spec=pltpu.PrefetchScalarGridSpec(
                num_scalar_prefetch=0,
                grid=grid,
                in_specs=[pl.BlockSpec((K, bR, bC), lambda i, j: (0, i, j))],
                out_specs=pl.BlockSpec((bR, bC), lambda i, j: (i, j)),
            ),
            compiler_params=pltpu.CompilerParams(
                dimension_semantics=("parallel", "parallel"),
                vmem_limit_bytes=vmem_limit,
            ),
            cost_estimate=pl.CostEstimate(
                flops=0, transcendentals=0, bytes_accessed=bytes_accessed
            ),
        )(logits)
    else:
        # Large K: trailing "arbitrary" reduction axis + VMEM accumulator keeps (bR, bC)
        # large and lane-dense at constant VMEM (input + output + f32 acc per step).
        bR, bC = _choose_tile(R, C, bytes_per_elem=in_bytes + 4 + 4, budget=budget)
        grid = (pl.cdiv(R, bR), pl.cdiv(C, bC), K)
        out2 = pl.pallas_call(
            _exemplar_reduce_kernel,
            out_shape=jax.ShapeDtypeStruct((R, C), jnp.float32),
            grid_spec=pltpu.PrefetchScalarGridSpec(
                num_scalar_prefetch=0,
                grid=grid,
                in_specs=[pl.BlockSpec((None, bR, bC), lambda i, j, k: (k, i, j))],
                out_specs=pl.BlockSpec((bR, bC), lambda i, j, k: (i, j)),
                scratch_shapes=[pltpu.VMEM((bR, bC), jnp.float32)],
            ),
            compiler_params=pltpu.CompilerParams(
                dimension_semantics=("parallel", "parallel", "arbitrary"),
                vmem_limit_bytes=vmem_limit,
            ),
            cost_estimate=pl.CostEstimate(
                flops=0, transcendentals=0, bytes_accessed=bytes_accessed
            ),
        )(logits)
    return out2.reshape(H, W, D)


# ----------------------------------------------------------------------------
# Python wrapper mirroring MOIS_SAM2Network.forward semantics
# (evaluation_mode / call_exemplar_post_inference are static host-side values,
#  matching the reference module's Python-level branching)
# ----------------------------------------------------------------------------
def mois_sam2_forward(x):
    evaluation_mode = x["evaluation_mode"]
    # torch: image = torch.squeeze(x['image'].cpu())[0]  -> (H, W, D)
    image = jnp.squeeze(x["image"])[0]
    if image.ndim != 3:
        raise ValueError(
            f"Expected a (H, W, D) image volume after squeeze()[0], got shape {image.shape}"
        )
    call_exemplar_post_inference = x["call_exemplar_post_inference"]

    if evaluation_mode == "global_corrective":
        # TODO(synk): the reference module's `pass` leaves `output` undefined on this
        # branch (it would raise at torch.Tensor(output)); we raise a clearer error.
        raise ValueError("global_corrective branch produces no output in the reference module")
    elif evaluation_mode in ("lesion_wise_non_corrective", "lesion_wise_corrective"):
        if not call_exemplar_post_inference:
            # TODO(synk): SAM2 predictor (add_new_points_or_box / propagate_in_video) has no
            # Pallas equivalent; its per-slice mask logits are supplied as inputs instead.
            fwd = x["sam2_forward_mask_logits"]   # (H, W, D)
            bwd = x["sam2_backward_mask_logits"]  # (H, W, D)
            assert fwd.shape == tuple(image.shape) and bwd.shape == tuple(image.shape)
            output = local_correction_aggregate(fwd, bwd)
        else:
            # TODO(synk): predictor.find_exemplars_in_slice (connected components, center of
            # mass) is not translatable; per-object mask logits are supplied as inputs.
            ex = x["sam2_exemplar_mask_logits"]   # (K, H, W, D)
            assert ex.shape[1:] == tuple(image.shape)
            output = exemplar_aggregate(ex)
    else:
        raise ValueError("Evaluation mode is not supported")

    # torch: torch.Tensor(output).unsqueeze(0).unsqueeze(0) -> (1, 1, H, W, D) float32
    return output[jnp.newaxis, jnp.newaxis].astype(jnp.float32)


# ----------------------------------------------------------------------------
# Deterministic smoke test + numpy reference check
# ----------------------------------------------------------------------------
if __name__ == "__main__":
    key = jax.random.PRNGKey(0)
    H, W, D = 16, 16, 8
    K_SMALL, K_LARGE = 3, 12   # exercise both the fused-K and the K-reduction paths
    k1, k2, k3, k4, k5 = jax.random.split(key, 5)

    # Image laid out like the MONAI pipeline input: (1, C, H, W, D), C > 1 so that
    # squeeze()[0] yields the (H, W, D) volume as in the reference forward.
    image = jax.random.normal(k1, (1, 3, H, W, D), dtype=jnp.float32)
    fwd_logits = jax.random.normal(k2, (H, W, D), dtype=jnp.float32)
    bwd_logits = jax.random.normal(k3, (H, W, D), dtype=jnp.float32)
    exemplar_small = jax.random.normal(k4, (K_SMALL, H, W, D), dtype=jnp.float32)
    exemplar_large = jax.random.normal(k5, (K_LARGE, H, W, D), dtype=jnp.float32)

    base = dict(
        evaluation_mode="lesion_wise_corrective",
        image=image,
        guidance=None,
        case_name="case_000",
        reset_state=True,
        reset_exemplars=True,
        current_instance_id=1,
        call_exemplar_post_inference=False,
        previous_prediction=None,
        previous_global_prediction=None,
        sam2_forward_mask_logits=fwd_logits,
        sam2_backward_mask_logits=bwd_logits,
        sam2_exemplar_mask_logits=exemplar_small,
    )

    # Branch 1: local correction mode (logical OR of forward / backward propagation masks)
    out_local = mois_sam2_forward(base)
    # Branch 1 with bf16 logits (exercises itemsize-aware block sizing)
    out_local_bf16 = mois_sam2_forward(dict(
        base,
        sam2_forward_mask_logits=fwd_logits.astype(jnp.bfloat16),
        sam2_backward_mask_logits=bwd_logits.astype(jnp.bfloat16),
    ))
    # Branch 2: exemplar post-inference, small K (fused reduction)
    out_ex_small = mois_sam2_forward(dict(base, call_exemplar_post_inference=True))
    # Branch 2: exemplar post-inference, large K (grid-axis reduction + accumulator)
    out_ex_large = mois_sam2_forward(dict(
        base, call_exemplar_post_inference=True, sam2_exemplar_mask_logits=exemplar_large))
    jax.block_until_ready((out_local, out_local_bf16, out_ex_small, out_ex_large))

    # Pure-numpy references
    ref_local = np.logical_or(
        np.asarray(fwd_logits) > 0.0, np.asarray(bwd_logits) > 0.0
    ).astype(np.float32)[None, None]
    ref_local_bf16 = np.logical_or(
        np.asarray(fwd_logits.astype(jnp.bfloat16)).astype(np.float32) > 0.0,
        np.asarray(bwd_logits.astype(jnp.bfloat16)).astype(np.float32) > 0.0,
    ).astype(np.float32)[None, None]
    ref_ex_small = (np.asarray(exemplar_small) > 0.0).astype(np.float32).max(axis=0)[None, None]
    ref_ex_large = (np.asarray(exemplar_large) > 0.0).astype(np.float32).max(axis=0)[None, None]

    assert out_local.shape == (1, 1, H, W, D)
    assert out_ex_small.shape == (1, 1, H, W, D)
    assert out_ex_large.shape == (1, 1, H, W, D)
    np.testing.assert_allclose(np.asarray(out_local), ref_local)
    np.testing.assert_allclose(np.asarray(out_local_bf16), ref_local_bf16)
    np.testing.assert_allclose(np.asarray(out_ex_small), ref_ex_small)
    np.testing.assert_allclose(np.asarray(out_ex_large), ref_ex_large)

    print("KERNEL_OK")
</pallas_src>

<mosaic_0001>
module attributes {stable_mosaic.version = 11 : i64} {
  func.func @_local_correction_kernel(%arg0: i32, %arg1: i32, %arg2: memref<8x128xf32, #tpu.memory_space<vmem>>, %arg3: memref<8x128xf32, #tpu.memory_space<vmem>>, %arg4: memref<8x128xf32, #tpu.memory_space<vmem>>) attributes {dimension_semantics = [#tpu.dimension_semantics<parallel>, #tpu.dimension_semantics<parallel>], iteration_bounds = array<i64: 2, 1>, scalar_prefetch = 0 : i64, scratch_operands = 0 : i64, tpu.core_type = #tpu.core_type<tc>, window_params = [{transform_indices = @transform_0, window_bounds = array<i64: 8, 128>}, {transform_indices = @transform_1, window_bounds = array<i64: 8, 128>}, {transform_indices = @transform_2, window_bounds = array<i64: 8, 128>}]} {
    %c0 = arith.constant 0 : index
    %c0_0 = arith.constant 0 : index
    %0 = vector.load %arg2[%c0, %c0_0] : memref<8x128xf32, #tpu.memory_space<vmem>>, vector<8x128xf32>
    %cst = arith.constant 0.000000e+00 : f32
    %1 = vector.broadcast %cst : f32 to vector<8x128xf32>
    %2 = arith.cmpf ogt, %0, %1 : vector<8x128xf32>
    %c0_1 = arith.constant 0 : index
    %c0_2 = arith.constant 0 : index
    %3 = vector.load %arg3[%c0_1, %c0_2] : memref<8x128xf32, #tpu.memory_space<vmem>>, vector<8x128xf32>
    %cst_3 = arith.constant 0.000000e+00 : f32
    %4 = vector.broadcast %cst_3 : f32 to vector<8x128xf32>
    %5 = arith.cmpf ogt, %3, %4 : vector<8x128xf32>
    %6 = arith.ori %2, %5 : vector<8x128xi1>
    %7 = arith.extui %6 : vector<8x128xi1> to vector<8x128xi32>
    %8 = arith.sitofp %7 : vector<8x128xi32> to vector<8x128xf32>
    %c0_4 = arith.constant 0 : index
    %c0_5 = arith.constant 0 : index
    %9 = vector.load %arg4[%c0_4, %c0_5] : memref<8x128xf32, #tpu.memory_space<vmem>>, vector<8x128xf32>
    tpu.vector_store %arg4[%c0_4, %c0_5], %8 {strides = array<i32>} : memref<8x128xf32, #tpu.memory_space<vmem>>, vector<8x128xf32>,
    return
  }
  func.func @transform_0(%arg0: i32, %arg1: i32) -> (i32, i32) {
    %c0_i32 = arith.constant 0 : i32
    return %arg0, %arg1 : i32, i32
  }
  func.func @transform_1(%arg0: i32, %arg1: i32) -> (i32, i32) {
    %c0_i32 = arith.constant 0 : i32
    return %arg0, %arg1 : i32, i32
  }
  func.func @transform_2(%arg0: i32, %arg1: i32) -> (i32, i32) {
    %c0_i32 = arith.constant 0 : i32
    return %arg0, %arg1 : i32, i32
  }
}

</mosaic_0001>

<llo_original>
// kernel: tpu_custom_call.1
$region0: #{tpu_custom_call.1}
  #allocation0 [shape = 'u32[]', space=smem, size = 0x4, offset = 0x4, fixed_abs, tag = 'smem constant byte address 0x4 - core index']
  #allocation1 [shape = 'u32[144,128]{1,0:T(1,128)}', space=vmem, size = 0x12000, scoped, tag = 'internal scratch']
  %s0 = inlined_call_operand.hbm [shape: f32[16,128], index: 0, kind: input, shape index: {}]
  %s1 = inlined_call_operand.hbm [shape: f32[16,128], index: 1, kind: input, shape index: {}]
  %s2 = inlined_call_operand.hbm [shape: f32[16,128], index: 2, kind: output, shape index: {}]
  %s3 = sld [smem:[#allocation0]]
  $region49: #{tpu_custom_call.1} parent=0
    _
  %s5 = ssub.s32 1, %s3
  %s6 = scalar_select 0, %s5, %s3
  $region1: #{tpu_custom_call.1} parent=0
    #allocation2 [shape = 'u8[8192]{0}', space=vmem, size = 0x2000, scoped, tag = 'input window, operand 0']
    #allocation3 [shape = 's32[2]{0}', space=sflag, size = 0x8, scoped, tag = 'scoped memory for tpu_custom_call.1']
    #allocation4 [shape = 's32[2]{0}', space=sflag, size = 0x8, scoped, tag = 'scoped memory for tpu_custom_call.1']
    #allocation5 [shape = 'u8[8192]{0}', space=vmem, size = 0x2000, scoped, tag = 'input window, operand 1']
    #allocation6 [shape = 's32[2]{0}', space=sflag, size = 0x8, scoped, tag = 'scoped memory for tpu_custom_call.1']
    #allocation7 [shape = 'u8[8192]{0}', space=vmem, size = 0x2000, scoped, tag = 'output window, operand 0']
    %7 = vsyncpa [#allocation3], 0
    %s8 = scalar_lea.sflag [#allocation3], 1
    %9 = vsyncpa %s8, 0
    %10 = vsyncpa [#allocation6], 0
    %s11 = scalar_lea.sflag [#allocation6], 1
    %12 = vsyncpa %s11, 0
    %13 = vsyncpa [#allocation4], 0
    %s14 = scalar_lea.sflag [#allocation4], 1
    %15 = vsyncpa %s14, 0
    loop: start=0, step=1, limit=4
    $region2: #{tpu_custom_call.1} parent=1 // loop_pre_header
      _
    $region3: #{tpu_custom_call.1} parent=1 // loop_header
      %s17 = sphi 0, %s21
      %p18 = scmp.ge.s32.totalorder %s17, 4
      %s24 = sphi 0, %s36
      %s25 = sphi 0, %s32
      %s26 = sphi 0, %s24
      %s27 = sphi 0, %s25
      %s28 = sphi 0, %s26
      %s29 = sphi 0, %s27
      %s41 = sphi 0, %s43
      %s44 = sphi 0, %s41
      %s45 = sphi 0, %s44
      %s61 = sphi 0, %s45
      %s69 = sphi 0, %s71
      %s72 = sphi 0, %s69
      %s73 = sphi 0, %s72
      %s89 = sphi 0, %s73
      %s97 = sphi 0, %s99
      %s100 = sphi 0, %s97
      %s101 = sphi 0, %s100
      %s117 = sphi 0, %s101
    $region4: #{tpu_custom_call.1} parent=1 // loop_header_branch
      %20 = sbr.rel (%p18) target = $region8
    $region5: #{tpu_custom_call.1} parent=1 // loop_body
      %s22 = ssub.s32 %s17, 1
      %s23 = ssub.s32 %s17, 2
      %s30 = sadd.s32 1, %s25
      %p31 = scmp.ge.s32.totalorder %s30, 1
      %s32 = scalar_select %p31, 0, %s30
      %s33 = sadd.s32 1, %s24
      %s34 = scalar_select %p31, %s33, %s24
      %p35 = scmp.ge.s32.totalorder %s34, 2
      %s36 = scalar_select %p35, 0, %s34
      %s37 = ssub.s32 %s24, %s36
      %s38 = ssub.s32 %s25, %s32
      %s39 = sor.u32 %s37, %s38
      %p40 = scmp.eq.s32.totalorder %s39, 0
      %s42 = sadd.s32 %s41, 1
      %s43 = scalar_select %p40, %s41, %s42
      %p46 = pneg %p40
      %p47 = scmp.eq.s32.totalorder %s17, 1
      %p48 = por %p46, %p47
      %p49 = scmp.ne.s32.totalorder %s41, %s44
      %p50 = scmp.eq.s32.totalorder %s17, 0
      %p51 = por %p49, %p50
      %p52 = scmp.ne.s32.totalorder %s41, %s44
      %p53 = scmp.eq.s32.totalorder %s22, 1
      %p54 = por %p52, %p53
      %p55 = scmp.ne.s32.totalorder %s44, %s45
      %p56 = scmp.eq.s32.totalorder %s22, 0
      %p57 = por %p55, %p56
      %p58 = scmp.ne.s32.totalorder %s44, %s45
      %p59 = scmp.eq.s32.totalorder %s23, 1
      %p60 = por %p58, %p59
      %p62 = scmp.ne.s32.totalorder %s45, %s61
      %p63 = scmp.eq.s32.totalorder %s23, 0
      %p64 = por %p62, %p63
      %s65 = ssub.s32 %s24, %s36
      %s66 = ssub.s32 %s25, %s32
      %s67 = sor.u32 %s65, %s66
      %p68 = scmp.eq.s32.totalorder %s67, 0
      %s70 = sadd.s32 %s69, 1
      %s71 = scalar_select %p68, %s69, %s70
      %p74 = pneg %p68
      %p75 = scmp.eq.s32.totalorder %s17, 1
      %p76 = por %p74, %p75
      %p77 = scmp.ne.s32.totalorder %s69, %s72
      %p78 = scmp.eq.s32.totalorder %s17, 0
      %p79 = por %p77, %p78
      %p80 = scmp.ne.s32.totalorder %s69, %s72
      %p81 = scmp.eq.s32.totalorder %s22, 1
      %p82 = por %p80, %p81
      %p83 = scmp.ne.s32.totalorder %s72, %s73
      %p84 = scmp.eq.s32.totalorder %s22, 0
      %p85 = por %p83, %p84
      %p86 = scmp.ne.s32.totalorder %s72, %s73
      %p87 = scmp.eq.s32.totalorder %s23, 1
      %p88 = por %p86, %p87
      %p90 = scmp.ne.s32.totalorder %s73, %s89
      %p91 = scmp.eq.s32.totalorder %s23, 0
      %p92 = por %p90, %p91
      %s93 = ssub.s32 %s24, %s36
      %s94 = ssub.s32 %s25, %s32
      %s95 = sor.u32 %s93, %s94
      %p96 = scmp.eq.s32.totalorder %s95, 0
      %s98 = sadd.s32 %s97, 1
      %s99 = scalar_select %p96, %s97, %s98
      %p102 = pneg %p96
      %p103 = scmp.eq.s32.totalorder %s17, 1
      %p104 = por %p102, %p103
      %p105 = scmp.ne.s32.totalorder %s97, %s100
      %p106 = scmp.eq.s32.totalorder %s17, 0
      %p107 = por %p105, %p106
      %p108 = scmp.ne.s32.totalorder %s97, %s100
      %p109 = scmp.eq.s32.totalorder %s22, 1
      %p110 = por %p108, %p109
      %p111 = scmp.ne.s32.totalorder %s100, %s101
      %p112 = scmp.eq.s32.totalorder %s22, 0
      %p113 = por %p111, %p112
      %p114 = scmp.ne.s32.totalorder %s100, %s101
      %p115 = scmp.eq.s32.totalorder %s23, 1
      %p116 = por %p114, %p115
      %p118 = scmp.ne.s32.totalorder %s101, %s117
      %p119 = scmp.eq.s32.totalorder %s23, 0
      %p120 = por %p118, %p119
      %p121 = scmp.le.s32.totalorder 1, %s17
      %p122 = scmp.lt.s32.totalorder %s17, 3
      %p123 = pnand %p121, %p122
      %p124 = pneg %p123
      // Predicated region
      $region9: #{tpu_custom_call.1} parent=5 // pred_check
        _
      $region10: #{tpu_custom_call.1} parent=5 // pred_check_branch
        %126 = sbr.rel (%p123) target = $region12
      $region11: #{tpu_custom_call.1} parent=5 // pred_region
        %s127 = ssub.s32 %s17, 1
      $region12: #{tpu_custom_call.1} parent=5 // pred_fallthru
        _
      %p128 = scmp.lt.s32.totalorder %s17, 2
      // Predicated region
      $region13: #{tpu_custom_call.1} parent=5 // pred_check
        %p129 = pneg %p128
      $region14: #{tpu_custom_call.1} parent=5 // pred_check_branch
        %131 = sbr.rel (%p129) target = $region16
      $region15: #{tpu_custom_call.1} parent=5 // pred_region
        // Predicated region
        $region17: #{tpu_custom_call.1} parent=15 // pred_check
          %p132 = pneg %p51
        $region18: #{tpu_custom_call.1} parent=15 // pred_check_branch
          %134 = sbr.rel (%p132) target = $region20
        $region19: #{tpu_custom_call.1} parent=15 // pred_region
          %s135 = sand.u32 %s41, 1
          %s136 = scalar_lea.sflag [#allocation3], %s135
          %s137 = sand.u32 %s41, 1
          %s138 = smul.addr %s137, 8
          %s139 = scalar_lea.vmem [#allocation2], %s138
          %s141 = ssub.s32 128, 128
          %142 = vsyncadd %s136, %s141
          %s143 = sadd.s32 %s25, %s24
          %s144 = smul.addr %s143, 128
          %s145 = scalar_lea.hbm %s0, %s144
          %s147 = sshll.u32 %s139, 4
          %s148 = int_to_ptr.vmem [resolvable:$true] %s147
          %150 = dma.hbm_to_vmem [thread:$0]  %s145, 128, %s148, %s136
        $region20: #{tpu_custom_call.1} parent=15 // pred_fallthru
          _
        // Predicated region
        $region21: #{tpu_custom_call.1} parent=15 // pred_check
          %p151 = pneg %p79
        $region22: #{tpu_custom_call.1} parent=15 // pred_check_branch
          %153 = sbr.rel (%p151) target = $region24
        $region23: #{tpu_custom_call.1} parent=15 // pred_region
          %s154 = sand.u32 %s69, 1
          %s155 = scalar_lea.sflag [#allocation6], %s154
          %s156 = sand.u32 %s69, 1
          %s157 = smul.addr %s156, 8
          %s158 = scalar_lea.vmem [#allocation5], %s157
          %s160 = ssub.s32 128, 128
          %161 = vsyncadd %s155, %s160
          %s162 = sadd.s32 %s25, %s24
          %s163 = smul.addr %s162, 128
          %s164 = scalar_lea.hbm %s1, %s163
          %s166 = sshll.u32 %s158, 4
          %s167 = int_to_ptr.vmem [resolvable:$true] %s166
          %169 = dma.hbm_to_vmem [thread:$0]  %s164, 128, %s167, %s155
        $region24: #{tpu_custom_call.1} parent=15 // pred_fallthru
          _
      $region16: #{tpu_custom_call.1} parent=5 // pred_fallthru
        _
      %p170 = scmp.le.s32.totalorder 1, %s17
      %p171 = scmp.lt.s32.totalorder %s17, 3
      %p172 = pnand %p170, %p171
      %p173 = pneg %p172
      // Predicated region
      $region25: #{tpu_custom_call.1} parent=5 // pred_check
        _
      $region26: #{tpu_custom_call.1} parent=5 // pred_check_branch
        %175 = sbr.rel (%p172) target = $region28
      $region27: #{tpu_custom_call.1} parent=5 // pred_region
        %s176 = ssub.s32 %s17, 1
        %s177 = sand.u32 %s44, 1
        %s178 = scalar_lea.sflag [#allocation3], %s177
        %s179 = sand.u32 %s44, 1
        %s180 = smul.addr %s179, 8
        %s181 = scalar_lea.vmem [#allocation2], %s180
        // Predicated region
        $region29: #{tpu_custom_call.1} parent=27 // pred_check
          %p182 = pneg %p57
        $region30: #{tpu_custom_call.1} parent=27 // pred_check_branch
          %184 = sbr.rel (%p182) target = $region32
        $region31: #{tpu_custom_call.1} parent=27 // pred_region
          %185 = dma.done %s178, 128
        $region32: #{tpu_custom_call.1} parent=27 // pred_fallthru
          _
        %s186 = sand.u32 %s72, 1
        %s187 = scalar_lea.sflag [#allocation6], %s186
        %s188 = sand.u32 %s72, 1
        %s189 = smul.addr %s188, 8
        %s190 = scalar_lea.vmem [#allocation5], %s189
        // Predicated region
        $region33: #{tpu_custom_call.1} parent=27 // pred_check
          %p191 = pneg %p85
        $region34: #{tpu_custom_call.1} parent=27 // pred_check_branch
          %193 = sbr.rel (%p191) target = $region36
        $region35: #{tpu_custom_call.1} parent=27 // pred_region
          %194 = dma.done %s187, 128
        $region36: #{tpu_custom_call.1} parent=27 // pred_fallthru
          _
        %s195 = sand.u32 %s44, 1
        %s196 = scalar_lea.sflag [#allocation3], %s195
        %s197 = sand.u32 %s44, 1
        %s198 = smul.addr %s197, 8
        %s199 = scalar_lea.vmem [#allocation2], %s198
        %p200 = pneg %p57
        %p201 = pneg %p54
        %s202 = sand.u32 %s72, 1
        %s203 = scalar_lea.sflag [#allocation6], %s202
        %s204 = sand.u32 %s72, 1
        %s205 = smul.addr %s204, 8
        %s206 = scalar_lea.vmem [#allocation5], %s205
        %p207 = pneg %p85
        %p208 = pneg %p82
        %p209 = pneg %p113
        %p210 = pneg %p110
        %s211 = sand.u32 %s100, 1
        %s212 = scalar_lea.sflag [#allocation4], %s211
        %s213 = sand.u32 %s100, 1
        %s214 = smul.addr %s213, 8
        %s215 = scalar_lea.vmem [#allocation7], %s214
        %v216 = vld [vmem:[%s181] sm:$0xff]
        %vm217 = vcmp.gt.f32.partialorder %v216, 0.0
        %v218 = vld [vmem:[%s190] sm:$0xff]
        %vm219 = vcmp.gt.f32.partialorder %v218, 0.0
        %vm220 = vmor %vm217, %vm219
        %v221 = vsel %vm220, 1, 0
        %v222 = vcvt.s32.f32 %v221
        %223 = vst [vmem:[%s215] sm:$0xff] %v222
        %s224 = sand.u32 %s100, 1
        %s225 = scalar_lea.sflag [#allocation4], %s224
        %s226 = sand.u32 %s100, 1
        %s227 = smul.addr %s226, 8
        %s228 = scalar_lea.vmem [#allocation7], %s227
        // Predicated region
        $region37: #{tpu_custom_call.1} parent=27 // pred_check
          %p229 = pneg %p110
        $region38: #{tpu_custom_call.1} parent=27 // pred_check_branch
          %231 = sbr.rel (%p229) target = $region40
        $region39: #{tpu_custom_call.1} parent=27 // pred_region
          %s233 = ssub.s32 128, 128
          %234 = vsyncadd %s225, %s233
          %s235 = sadd.s32 %s27, %s26
          %s236 = smul.addr %s235, 128
          %s237 = scalar_lea.hbm %s2, %s236
          %s239 = sshll.u32 %s228, 4
          %s240 = int_to_ptr.vmem [resolvable:$true] %s239
          %242 = dma.vmem_to_hbm [thread:$0]  %s240, 128, %s237, %s225
        $region40: #{tpu_custom_call.1} parent=27 // pred_fallthru
          _
      $region28: #{tpu_custom_call.1} parent=5 // pred_fallthru
        _
      %p243 = scmp.le.s32.totalorder 2, %s17
      // Predicated region
      $region41: #{tpu_custom_call.1} parent=5 // pred_check
        %p244 = pneg %p243
      $region42: #{tpu_custom_call.1} parent=5 // pred_check_branch
        %246 = sbr.rel (%p244) target = $region44
      $region43: #{tpu_custom_call.1} parent=5 // pred_region
        %s247 = ssub.s32 %s17, 2
        // Predicated region
        $region45: #{tpu_custom_call.1} parent=43 // pred_check
          %p248 = pneg %p116
        $region46: #{tpu_custom_call.1} parent=43 // pred_check_branch
          %250 = sbr.rel (%p248) target = $region48
        $region47: #{tpu_custom_call.1} parent=43 // pred_region
          %s251 = sand.u32 %s101, 1
          %s252 = scalar_lea.sflag [#allocation4], %s251
          %s253 = sand.u32 %s101, 1
          %s254 = smul.addr %s253, 8
          %s255 = scalar_lea.vmem [#allocation7], %s254
          %256 = dma.done %s252, 128
        $region48: #{tpu_custom_call.1} parent=43 // pred_fallthru
          _
      $region44: #{tpu_custom_call.1} parent=5 // pred_fallthru
        _
    $region6: #{tpu_custom_call.1} parent=1 // loop_footer
      %s21 = sadd.s32 1, %s17
    $region7: #{tpu_custom_call.1} parent=1 // loop_footer_branch
      %16 = sbr.rel target = $region3
    $region8: #{tpu_custom_call.1} parent=1 // loop_exit
      _
    %257 = vsyncpa [#allocation3], 1
    %s258 = scalar_lea.sflag [#allocation3], 1
    %259 = vsyncpa %s258, 1
    %260 = vsyncpa [#allocation6], 1
    %s261 = scalar_lea.sflag [#allocation6], 1
    %262 = vsyncpa %s261, 1
    %263 = vsyncpa [#allocation4], 1
    %s264 = scalar_lea.sflag [#allocation4], 1
    %265 = vsyncpa %s264, 1

</llo_original>
